<compile_context>
chip_gen: v5e
topology: v5e:2x2
jax: 0.10.0
libtpu: 0.0.40
codegen_flags: <defaults>
</compile_context>

<pallas_src>
import functools

import jax
import jax.numpy as jnp
from jax.experimental import pallas as pl
from jax.experimental.pallas import tpu as pltpu


def _round_up(n, m):
    return ((n + m - 1) // m) * m


def _pick_row_tile(Ho, Wq, C, itemsize):
    """Output rows per grid step: TP | Ho and (TP % 8 == 0 or TP == Ho)."""
    budget = 4 * 1024 * 1024  # per-step input block target (Pallas double-buffers it)
    cands = [tp for tp in range(8, Ho + 1, 8) if Ho % tp == 0]
    if not cands:
        return Ho  # tiny / odd Ho: one row tile per image (full-dim block is legal)

    def in_bytes(tp):
        return 4 * C * _round_up((tp + 1) * Wq + 1, 128) * itemsize

    good = [tp for tp in cands if in_bytes(tp) <= budget]
    return max(good) if good else min(cands)


def _downsample_kernel(xw_ref, wg_ref, o_ref, acc_ref, *, wq, tp, wo):
    """One (batch, row-tile) step of the fused conv3x3 + PixelUnshuffle(2).

    xw_ref : (4*C, Lw)     phase-stacked, row-windowed, row-major-flattened input
    wg_ref : (4, OC, 4*C)  weights grouped by (da, db) stride-2 tap offset
    o_ref  : (OC, TP, Wo)  final output tile (unshuffled layout, stored directly)
    acc_ref: (OC, TP*Wq)   f32 accumulator (one garbage column at the end of each row)
    """
    L = tp * wq
    for g in range(4):                                   # g = 2*da + db
        da, db = g // 2, g % 2
        xg = xw_ref[:, pl.ds(da * wq + db, L)]           # (4C, L): folded K = 4*C tap
        contrib = jnp.dot(wg_ref[g], xg, preferred_element_type=jnp.float32)
        if g == 0:
            acc_ref[...] = contrib
        else:
            acc_ref[...] += contrib
    # Fused epilogue: drop the per-row garbage column and store the final layout.
    for p in range(tp):
        o_ref[:, p, :] = acc_ref[:, pl.ds(p * wq, wo)].astype(o_ref.dtype)


@jax.jit
def downsample(x, weight):
    """x: (B, C, H, W) NCHW; weight: (C//2, C, 3, 3). Returns (B, 2*(C//2)*2, H/2, W/2)."""
    B, C, H, W = x.shape
    Co = weight.shape[0]
    assert weight.shape[1:] == (C, 3, 3)
    assert H % 2 == 0 and W % 2 == 0
    OC = 4 * Co
    Ho, Wo = H // 2, W // 2
    Hq, Wq = Ho + 1, Wo + 1                      # phase-plane extents of padded image
    itemsize = jnp.dtype(x.dtype).itemsize

    TP = _pick_row_tile(Ho, Wq, C, itemsize)     # output rows per grid step
    T = Ho // TP
    Lraw = (TP + 1) * Wq
    Lw = _round_up(Lraw + 1, 128)                # +1 for the last (da=1,db=1) garbage elem

    # ---- input prep: pad + parity phase split + overlapping row windows (+1 halo
    # row per tile) + flatten + lane pad.  One fused XLA producer over x. ----------
    x_pad = jnp.pad(x, ((0, 0), (0, 0), (1, 1), (1, 1)))           # (B, C, H+2, W+2)
    xph = x_pad.reshape(B, C, Hq, 2, Wq, 2)                        # (..., hh, pa, ww, pb)
    row_idx = jnp.arange(T)[:, None] * TP + jnp.arange(TP + 1)[None, :]   # (T, TP+1)
    xw = xph[:, :, row_idx]                                        # (B, C, T, TP+1, 2, Wq, 2)
    xw = xw.transpose(0, 2, 4, 6, 1, 3, 5)                         # (B, T, pa, pb, C, TP+1, Wq)
    xw = xw.reshape(B, T, 4 * C, Lraw)
    xw = jnp.pad(xw, ((0, 0), (0, 0), (0, 0), (0, Lw - Lraw)))

    # ---- weights: 3x3 conv + unshuffle == 4x4 stride-2 conv; group by (da, db). ----
    w4 = jnp.stack(
        [jnp.pad(weight, ((0, 0), (0, 0), (i, 1 - i), (j, 1 - j)))
         for i in (0, 1) for j in (0, 1)],
        axis=1,
    ).reshape(OC, C, 4, 4)                                         # oc = co*4 + 2i + j
    wg = (
        w4.reshape(OC, C, 2, 2, 2, 2)                              # (oc, c, da, pa, db, pb)
        .transpose(2, 4, 0, 3, 5, 1)                               # (da, db, oc, pa, pb, c)
        .reshape(4, OC, 4 * C)
        .astype(x.dtype)
    )

    cost = pl.CostEstimate(
        flops=2 * B * T * 4 * OC * (4 * C) * (TP * Wq),
        transcendentals=0,
        bytes_accessed=(B * T * 4 * C * Lw + B * OC * Ho * Wo + 4 * OC * 4 * C) * itemsize,
    )

    out = pl.pallas_call(
        functools.partial(_downsample_kernel, wq=Wq, tp=TP, wo=Wo),
        out_shape=jax.ShapeDtypeStruct((B, OC, Ho, Wo), x.dtype),
        grid_spec=pltpu.PrefetchScalarGridSpec(
            num_scalar_prefetch=0,
            grid=(B, T),
            in_specs=[
                # Batch / tile dims squeezed -> kernel refs are small and lane-dense.
                pl.BlockSpec((None, None, 4 * C, Lw), lambda b, t: (b, t, 0, 0)),
                pl.BlockSpec((4, OC, 4 * C), lambda b, t: (0, 0, 0)),
            ],
            out_specs=pl.BlockSpec((None, OC, TP, Wo), lambda b, t: (b, 0, t, 0)),
            scratch_shapes=[pltpu.VMEM((OC, TP * Wq), jnp.float32)],
        ),
        compiler_params=pltpu.CompilerParams(
            dimension_semantics=("parallel", "parallel"),   # megacore / v7x 2-TC sharding
            vmem_limit_bytes=32 * 1024 * 1024,
        ),
        cost_estimate=cost,
    )(xw, wg)
    return out


def _reference(x, weight):
    """Pure-JAX reference mirroring the PyTorch module."""
    y = jax.lax.conv_general_dilated(
        x, weight,
        window_strides=(1, 1),
        padding=((1, 1), (1, 1)),
        dimension_numbers=("NCHW", "OIHW", "NCHW"),
    )
    B, Co, H, W = y.shape
    Ho, Wo = H // 2, W // 2
    return (
        y.reshape(B, Co, Ho, 2, Wo, 2)
        .transpose(0, 1, 3, 5, 2, 4)
        .reshape(B, Co * 4, Ho, Wo)
    )


if __name__ == "__main__":
    # Small shapes consistent with the module: n_feat = C = 4, spatial 16x16.
    B, C, H, W = 2, 4, 16, 16
    Co = C // 2

    key = jax.random.PRNGKey(0)
    kx, kw = jax.random.split(key)

    x = jax.random.normal(kx, (B, C, H, W), dtype=jnp.float32)

    # PyTorch Conv2d default init: uniform(+-1/sqrt(fan_in)), fan_in = C*3*3.
    bound = 1.0 / ((C * 3 * 3) ** 0.5)
    weight = jax.random.uniform(
        kw, (Co, C, 3, 3), minval=-bound, maxval=bound, dtype=jnp.float32
    )

    out = downsample(x, weight)
    out = jax.block_until_ready(out)

    ref = _reference(x, weight)
    assert out.shape == (B, 2 * C, H // 2, W // 2), out.shape
    assert jnp.allclose(out, ref, atol=1e-4, rtol=1e-4), float(
        jnp.max(jnp.abs(out - ref))
    )

    print("KERNEL_OK")
</pallas_src>

<mosaic_0001>
module attributes {stable_mosaic.version = 11 : i64} {
  func.func @_downsample_kernel(%arg0: i32, %arg1: i32, %arg2: memref<1x1x16x128xf32, #tpu.memory_space<vmem>>, %arg3: memref<4x8x16xf32, #tpu.memory_space<vmem>>, %arg4: memref<1x8x8x8xf32, #tpu.memory_space<vmem>>, %arg5: memref<8x72xf32, #tpu.memory_space<vmem>>) attributes {dimension_semantics = [#tpu.dimension_semantics<parallel>, #tpu.dimension_semantics<parallel>], iteration_bounds = array<i64: 2, 1>, scalar_prefetch = 0 : i64, scratch_operands = 1 : i64, tpu.core_type = #tpu.core_type<tc>, window_params = [{transform_indices = @transform_0, window_bounds = array<i64: 1, 1, 16, 128>}, {pipeline_mode = #tpu.pipeline_mode<synchronous>, transform_indices = @transform_1, window_bounds = array<i64: 4, 8, 16>}, {transform_indices = @transform_2, window_bounds = array<i64: 1, 8, 8, 8>}]} {
    %c0 = arith.constant 0 : index
    %c0_0 = arith.constant 0 : index
    %c0_1 = arith.constant 0 : index
    %c0_2 = arith.constant 0 : index
    %0 = vector.load %arg2[%c0, %c0_0, %c0_1, %c0_2] : memref<1x1x16x128xf32, #tpu.memory_space<vmem>>, vector<1x1x16x72xf32>
    %1 = vector.shape_cast %0 : vector<1x1x16x72xf32> to vector<16x72xf32>
    %c0_3 = arith.constant 0 : index
    %c0_4 = arith.constant 0 : index
    %c0_5 = arith.constant 0 : index
    %2 = vector.load %arg3[%c0_3, %c0_4, %c0_5] : memref<4x8x16xf32, #tpu.memory_space<vmem>>, vector<1x8x16xf32>
    %3 = vector.shape_cast %2 : vector<1x8x16xf32> to vector<8x16xf32>
    %cst = arith.constant dense<0.000000e+00> : vector<8x72xf32>
    %4 = tpu.matmul %3, %1, %cst {dimension_numbers = #tpu.dot_dimension_numbers<[1], [0], [0], [1], [0, 0, 1, 1], [], []>} : vector<8x16xf32>, vector<16x72xf32>, vector<8x72xf32> -> vector<8x72xf32>
    %c0_6 = arith.constant 0 : index
    %c0_7 = arith.constant 0 : index
    %5 = vector.load %arg5[%c0_6, %c0_7] : memref<8x72xf32, #tpu.memory_space<vmem>>, vector<8x72xf32>
    tpu.vector_store %arg5[%c0_6, %c0_7], %4 {strides = array<i32>} : memref<8x72xf32, #tpu.memory_space<vmem>>, vector<8x72xf32>,
    %c0_8 = arith.constant 0 : index
    %c0_9 = arith.constant 0 : index
    %c0_10 = arith.constant 0 : index
    %c1 = arith.constant 1 : index
    %6 = vector.load %arg2[%c0_8, %c0_9, %c0_10, %c1] : memref<1x1x16x128xf32, #tpu.memory_space<vmem>>, vector<1x1x16x72xf32>
    %7 = vector.shape_cast %6 : vector<1x1x16x72xf32> to vector<16x72xf32>
    %c1_11 = arith.constant 1 : index
    %c0_12 = arith.constant 0 : index
    %c0_13 = arith.constant 0 : index
    %8 = vector.load %arg3[%c1_11, %c0_12, %c0_13] : memref<4x8x16xf32, #tpu.memory_space<vmem>>, vector<1x8x16xf32>
    %9 = vector.shape_cast %8 : vector<1x8x16xf32> to vector<8x16xf32>
    %cst_14 = arith.constant dense<0.000000e+00> : vector<8x72xf32>
    %10 = tpu.matmul %9, %7, %cst_14 {dimension_numbers = #tpu.dot_dimension_numbers<[1], [0], [0], [1], [0, 0, 1, 1], [], []>} : vector<8x16xf32>, vector<16x72xf32>, vector<8x72xf32> -> vector<8x72xf32>
    %c0_15 = arith.constant 0 : index
    %c0_16 = arith.constant 0 : index
    %11 = vector.load %arg5[%c0_15, %c0_16] : memref<8x72xf32, #tpu.memory_space<vmem>>, vector<8x72xf32>
    %12 = arith.addf %11, %10 : vector<8x72xf32>
    %c0_17 = arith.constant 0 : index
    %c0_18 = arith.constant 0 : index
    %13 = vector.load %arg5[%c0_17, %c0_18] : memref<8x72xf32, #tpu.memory_space<vmem>>, vector<8x72xf32>
    tpu.vector_store %arg5[%c0_17, %c0_18], %12 {strides = array<i32>} : memref<8x72xf32, #tpu.memory_space<vmem>>, vector<8x72xf32>,
    %c0_19 = arith.constant 0 : index
    %c0_20 = arith.constant 0 : index
    %c0_21 = arith.constant 0 : index
    %c9 = arith.constant 9 : index
    %14 = vector.load %arg2[%c0_19, %c0_20, %c0_21, %c9] : memref<1x1x16x128xf32, #tpu.memory_space<vmem>>, vector<1x1x16x72xf32>
    %15 = vector.shape_cast %14 : vector<1x1x16x72xf32> to vector<16x72xf32>
    %c2 = arith.constant 2 : index
    %c0_22 = arith.constant 0 : index
    %c0_23 = arith.constant 0 : index
    %16 = vector.load %arg3[%c2, %c0_22, %c0_23] : memref<4x8x16xf32, #tpu.memory_space<vmem>>, vector<1x8x16xf32>
    %17 = vector.shape_cast %16 : vector<1x8x16xf32> to vector<8x16xf32>
    %cst_24 = arith.constant dense<0.000000e+00> : vector<8x72xf32>
    %18 = tpu.matmul %17, %15, %cst_24 {dimension_numbers = #tpu.dot_dimension_numbers<[1], [0], [0], [1], [0, 0, 1, 1], [], []>} : vector<8x16xf32>, vector<16x72xf32>, vector<8x72xf32> -> vector<8x72xf32>
    %c0_25 = arith.constant 0 : index
    %c0_26 = arith.constant 0 : index
    %19 = vector.load %arg5[%c0_25, %c0_26] : memref<8x72xf32, #tpu.memory_space<vmem>>, vector<8x72xf32>
    %20 = arith.addf %19, %18 : vector<8x72xf32>
    %c0_27 = arith.constant 0 : index
    %c0_28 = arith.constant 0 : index
    %21 = vector.load %arg5[%c0_27, %c0_28] : memref<8x72xf32, #tpu.memory_space<vmem>>, vector<8x72xf32>
    tpu.vector_store %arg5[%c0_27, %c0_28], %20 {strides = array<i32>} : memref<8x72xf32, #tpu.memory_space<vmem>>, vector<8x72xf32>,
    %c0_29 = arith.constant 0 : index
    %c0_30 = arith.constant 0 : index
    %c0_31 = arith.constant 0 : index
    %c10 = arith.constant 10 : index
    %22 = vector.load %arg2[%c0_29, %c0_30, %c0_31, %c10] : memref<1x1x16x128xf32, #tpu.memory_space<vmem>>, vector<1x1x16x72xf32>
    %23 = vector.shape_cast %22 : vector<1x1x16x72xf32> to vector<16x72xf32>
    %c3 = arith.constant 3 : index
    %c0_32 = arith.constant 0 : index
    %c0_33 = arith.constant 0 : index
    %24 = vector.load %arg3[%c3, %c0_32, %c0_33] : memref<4x8x16xf32, #tpu.memory_space<vmem>>, vector<1x8x16xf32>
    %25 = vector.shape_cast %24 : vector<1x8x16xf32> to vector<8x16xf32>
    %cst_34 = arith.constant dense<0.000000e+00> : vector<8x72xf32>
    %26 = tpu.matmul %25, %23, %cst_34 {dimension_numbers = #tpu.dot_dimension_numbers<[1], [0], [0], [1], [0, 0, 1, 1], [], []>} : vector<8x16xf32>, vector<16x72xf32>, vector<8x72xf32> -> vector<8x72xf32>
    %c0_35 = arith.constant 0 : index
    %c0_36 = arith.constant 0 : index
    %27 = vector.load %arg5[%c0_35, %c0_36] : memref<8x72xf32, #tpu.memory_space<vmem>>, vector<8x72xf32>
    %28 = arith.addf %27, %26 : vector<8x72xf32>
    %c0_37 = arith.constant 0 : index
    %c0_38 = arith.constant 0 : index
    %29 = vector.load %arg5[%c0_37, %c0_38] : memref<8x72xf32, #tpu.memory_space<vmem>>, vector<8x72xf32>
    tpu.vector_store %arg5[%c0_37, %c0_38], %28 {strides = array<i32>} : memref<8x72xf32, #tpu.memory_space<vmem>>, vector<8x72xf32>,
    %c0_39 = arith.constant 0 : index
    %c0_40 = arith.constant 0 : index
    %30 = vector.load %arg5[%c0_39, %c0_40] : memref<8x72xf32, #tpu.memory_space<vmem>>, vector<8x8xf32>
    %c0_41 = arith.constant 0 : index
    %c0_42 = arith.constant 0 : index
    %c0_43 = arith.constant 0 : index
    %c0_44 = arith.constant 0 : index
    %31 = vector.load %arg4[%c0_41, %c0_42, %c0_43, %c0_44] : memref<1x8x8x8xf32, #tpu.memory_space<vmem>>, vector<1x8x1x8xf32>
    %32 = vector.shape_cast %31 : vector<1x8x1x8xf32> to vector<8x8xf32>
    %33 = vector.shape_cast %30 : vector<8x8xf32> to vector<1x8x1x8xf32>
    tpu.vector_store %arg4[%c0_41, %c0_42, %c0_43, %c0_44], %33 {strides = array<i32>} : memref<1x8x8x8xf32, #tpu.memory_space<vmem>>, vector<1x8x1x8xf32>,
    %c0_45 = arith.constant 0 : index
    %c9_46 = arith.constant 9 : index
    %34 = vector.load %arg5[%c0_45, %c9_46] : memref<8x72xf32, #tpu.memory_space<vmem>>, vector<8x8xf32>
    %c0_47 = arith.constant 0 : index
    %c0_48 = arith.constant 0 : index
    %c1_49 = arith.constant 1 : index
    %c0_50 = arith.constant 0 : index
    %35 = vector.load %arg4[%c0_47, %c0_48, %c1_49, %c0_50] : memref<1x8x8x8xf32, #tpu.memory_space<vmem>>, vector<1x8x1x8xf32>
    %36 = vector.shape_cast %35 : vector<1x8x1x8xf32> to vector<8x8xf32>
    %37 = vector.shape_cast %34 : vector<8x8xf32> to vector<1x8x1x8xf32>
    tpu.vector_store %arg4[%c0_47, %c0_48, %c1_49, %c0_50], %37 {strides = array<i32>} : memref<1x8x8x8xf32, #tpu.memory_space<vmem>>, vector<1x8x1x8xf32>,
    %c0_51 = arith.constant 0 : index
    %c18 = arith.constant 18 : index
    %38 = vector.load %arg5[%c0_51, %c18] : memref<8x72xf32, #tpu.memory_space<vmem>>, vector<8x8xf32>
    %c0_52 = arith.constant 0 : index
    %c0_53 = arith.constant 0 : index
    %c2_54 = arith.constant 2 : index
    %c0_55 = arith.constant 0 : index
    %39 = vector.load %arg4[%c0_52, %c0_53, %c2_54, %c0_55] : memref<1x8x8x8xf32, #tpu.memory_space<vmem>>, vector<1x8x1x8xf32>
    %40 = vector.shape_cast %39 : vector<1x8x1x8xf32> to vector<8x8xf32>
    %41 = vector.shape_cast %38 : vector<8x8xf32> to vector<1x8x1x8xf32>
    tpu.vector_store %arg4[%c0_52, %c0_53, %c2_54, %c0_55], %41 {strides = array<i32>} : memref<1x8x8x8xf32, #tpu.memory_space<vmem>>, vector<1x8x1x8xf32>,
    %c0_56 = arith.constant 0 : index
    %c27 = arith.constant 27 : index
    %42 = vector.load %arg5[%c0_56, %c27] : memref<8x72xf32, #tpu.memory_space<vmem>>, vector<8x8xf32>
    %c0_57 = arith.constant 0 : index
    %c0_58 = arith.constant 0 : index
    %c3_59 = arith.constant 3 : index
    %c0_60 = arith.constant 0 : index
    %43 = vector.load %arg4[%c0_57, %c0_58, %c3_59, %c0_60] : memref<1x8x8x8xf32, #tpu.memory_space<vmem>>, vector<1x8x1x8xf32>
    %44 = vector.shape_cast %43 : vector<1x8x1x8xf32> to vector<8x8xf32>
    %45 = vector.shape_cast %42 : vector<8x8xf32> to vector<1x8x1x8xf32>
    tpu.vector_store %arg4[%c0_57, %c0_58, %c3_59, %c0_60], %45 {strides = array<i32>} : memref<1x8x8x8xf32, #tpu.memory_space<vmem>>, vector<1x8x1x8xf32>,
    %c0_61 = arith.constant 0 : index
    %c36 = arith.constant 36 : index
    %46 = vector.load %arg5[%c0_61, %c36] : memref<8x72xf32, #tpu.memory_space<vmem>>, vector<8x8xf32>
    %c0_62 = arith.constant 0 : index
    %c0_63 = arith.constant 0 : index
    %c4 = arith.constant 4 : index
    %c0_64 = arith.constant 0 : index
    %47 = vector.load %arg4[%c0_62, %c0_63, %c4, %c0_64] : memref<1x8x8x8xf32, #tpu.memory_space<vmem>>, vector<1x8x1x8xf32>
    %48 = vector.shape_cast %47 : vector<1x8x1x8xf32> to vector<8x8xf32>
    %49 = vector.shape_cast %46 : vector<8x8xf32> to vector<1x8x1x8xf32>
    tpu.vector_store %arg4[%c0_62, %c0_63, %c4, %c0_64], %49 {strides = array<i32>} : memref<1x8x8x8xf32, #tpu.memory_space<vmem>>, vector<1x8x1x8xf32>,
    %c0_65 = arith.constant 0 : index
    %c45 = arith.constant 45 : index
    %50 = vector.load %arg5[%c0_65, %c45] : memref<8x72xf32, #tpu.memory_space<vmem>>, vector<8x8xf32>
    %c0_66 = arith.constant 0 : index
    %c0_67 = arith.constant 0 : index
    %c5 = arith.constant 5 : index
    %c0_68 = arith.constant 0 : index
    %51 = vector.load %arg4[%c0_66, %c0_67, %c5, %c0_68] : memref<1x8x8x8xf32, #tpu.memory_space<vmem>>, vector<1x8x1x8xf32>
    %52 = vector.shape_cast %51 : vector<1x8x1x8xf32> to vector<8x8xf32>
    %53 = vector.shape_cast %50 : vector<8x8xf32> to vector<1x8x1x8xf32>
    tpu.vector_store %arg4[%c0_66, %c0_67, %c5, %c0_68], %53 {strides = array<i32>} : memref<1x8x8x8xf32, #tpu.memory_space<vmem>>, vector<1x8x1x8xf32>,
    %c0_69 = arith.constant 0 : index
    %c54 = arith.constant 54 : index
    %54 = vector.load %arg5[%c0_69, %c54] : memref<8x72xf32, #tpu.memory_space<vmem>>, vector<8x8xf32>
    %c0_70 = arith.constant 0 : index
    %c0_71 = arith.constant 0 : index
    %c6 = arith.constant 6 : index
    %c0_72 = arith.constant 0 : index
    %55 = vector.load %arg4[%c0_70, %c0_71, %c6, %c0_72] : memref<1x8x8x8xf32, #tpu.memory_space<vmem>>, vector<1x8x1x8xf32>
    %56 = vector.shape_cast %55 : vector<1x8x1x8xf32> to vector<8x8xf32>
    %57 = vector.shape_cast %54 : vector<8x8xf32> to vector<1x8x1x8xf32>
    tpu.vector_store %arg4[%c0_70, %c0_71, %c6, %c0_72], %57 {strides = array<i32>} : memref<1x8x8x8xf32, #tpu.memory_space<vmem>>, vector<1x8x1x8xf32>,
    %c0_73 = arith.constant 0 : index
    %c63 = arith.constant 63 : index
    %58 = vector.load %arg5[%c0_73, %c63] : memref<8x72xf32, #tpu.memory_space<vmem>>, vector<8x8xf32>
    %c0_74 = arith.constant 0 : index
    %c0_75 = arith.constant 0 : index
    %c7 = arith.constant 7 : index
    %c0_76 = arith.constant 0 : index
    %59 = vector.load %arg4[%c0_74, %c0_75, %c7, %c0_76] : memref<1x8x8x8xf32, #tpu.memory_space<vmem>>, vector<1x8x1x8xf32>
    %60 = vector.shape_cast %59 : vector<1x8x1x8xf32> to vector<8x8xf32>
    %61 = vector.shape_cast %58 : vector<8x8xf32> to vector<1x8x1x8xf32>
    tpu.vector_store %arg4[%c0_74, %c0_75, %c7, %c0_76], %61 {strides = array<i32>} : memref<1x8x8x8xf32, #tpu.memory_space<vmem>>, vector<1x8x1x8xf32>,
    return
  }
  func.func @transform_0(%arg0: i32, %arg1: i32) -> (i32, i32, i32, i32) {
    %c0_i32 = arith.constant 0 : i32
    %c0_i32_0 = arith.constant 0 : i32
    %c0_i32_1 = arith.constant 0 : i32
    return %arg0, %arg1, %c0_i32, %c0_i32_0 : i32, i32, i32, i32
  }
  func.func @transform_1(%arg0: i32, %arg1: i32) -> (i32, i32, i32) {
    %c0_i32 = arith.constant 0 : i32
    %c0_i32_0 = arith.constant 0 : i32
    %c0_i32_1 = arith.constant 0 : i32
    %c0_i32_2 = arith.constant 0 : i32
    return %c0_i32, %c0_i32_0, %c0_i32_1 : i32, i32, i32
  }
  func.func @transform_2(%arg0: i32, %arg1: i32) -> (i32, i32, i32, i32) {
    %c0_i32 = arith.constant 0 : i32
    %c0_i32_0 = arith.constant 0 : i32
    %c0_i32_1 = arith.constant 0 : i32
    return %arg0, %c0_i32, %arg1, %c0_i32_0 : i32, i32, i32, i32
  }
}

</mosaic_0001>

<llo_original>
// kernel: downsample.1
$region0: #{downsample.1}
  #allocation0 [shape = 'u32[]', space=smem, size = 0x4, offset = 0x4, fixed_abs, tag = 'smem constant byte address 0x4 - core index']
  #allocation1 [shape = 'u32[72,128]{1,0:T(1,128)}', space=vmem, size = 0x9000, scoped, tag = 'internal scratch']
  #allocation2 [shape = 'f32[8,72]{1,0:T(8,128)}', space=vmem, size = 0x1000, scoped, tag = 'scratch operand']
  %s0 = inlined_call_operand.vmem [shape: f32[2,1,16,128], index: 0, kind: input, shape index: {}]
  %s1 = inlined_call_operand.vmem [shape: f32[4,8,16], index: 1, kind: input, shape index: {}]
  %s2 = inlined_call_operand.hbm [shape: f32[2,8,8,8], index: 2, kind: output, shape index: {}]
  %s3 = sld [smem:[#allocation0]]
  $region41: #{downsample.1} parent=0
    _
  %s5 = ssub.s32 1, %s3
  %s6 = scalar_select 0, %s5, %s3
  $region1: #{downsample.1} parent=0
    #allocation3 [shape = 'u8[65536]{0}', space=vmem, size = 0x10000, scoped, tag = 'output window, operand 0']
    #allocation4 [shape = 's32[2]{0}', space=sflag, size = 0x8, scoped, tag = 'scoped memory for downsample.1']
    %7 = vsyncpa [#allocation4], 0
    %s8 = scalar_lea.sflag [#allocation4], 1
    %9 = vsyncpa %s8, 0
    loop: start=0, step=1, limit=4
    $region2: #{downsample.1} parent=1 // loop_pre_header
      _
    $region3: #{downsample.1} parent=1 // loop_header
      %s11 = sphi 0, %s15
      %p12 = scmp.ge.s32.totalorder %s11, 4
      %s18 = sphi 0, %s30
      %s19 = sphi 0, %s26
      %s20 = sphi 0, %s18
      %s21 = sphi 0, %s19
      %s22 = sphi 0, %s20
      %s23 = sphi 0, %s21
      %s35 = sphi 0, %s37
      %s38 = sphi 0, %s35
      %s39 = sphi 0, %s38
      %s55 = sphi 0, %s39
      %s59 = sphi 0, %s59
      %s61 = sphi 0, %s59
      %s62 = sphi 0, %s61
      %s76 = sphi 0, %s62
      %s84 = sphi 0, %s86
      %s87 = sphi 0, %s84
      %s88 = sphi 0, %s87
      %s104 = sphi 0, %s88
    $region4: #{downsample.1} parent=1 // loop_header_branch
      %14 = sbr.rel (%p12) target = $region8
    $region5: #{downsample.1} parent=1 // loop_body
      %s16 = ssub.s32 %s11, 1
      %s17 = ssub.s32 %s11, 2
      %s24 = sadd.s32 1, %s19
      %p25 = scmp.ge.s32.totalorder %s24, 1
      %s26 = scalar_select %p25, 0, %s24
      %s27 = sadd.s32 1, %s18
      %s28 = scalar_select %p25, %s27, %s18
      %p29 = scmp.ge.s32.totalorder %s28, 2
      %s30 = scalar_select %p29, 0, %s28
      %s31 = ssub.s32 %s18, %s30
      %s32 = ssub.s32 %s19, %s26
      %s33 = sor.u32 %s31, %s32
      %p34 = scmp.eq.s32.totalorder %s33, 0
      %s36 = sadd.s32 %s35, 1
      %s37 = scalar_select %p34, %s35, %s36
      %p40 = pneg %p34
      %p41 = scmp.eq.s32.totalorder %s11, 1
      %p42 = por %p40, %p41
      %p43 = scmp.ne.s32.totalorder %s35, %s38
      %p44 = scmp.eq.s32.totalorder %s11, 0
      %p45 = por %p43, %p44
      %p46 = scmp.ne.s32.totalorder %s35, %s38
      %p47 = scmp.eq.s32.totalorder %s16, 1
      %p48 = por %p46, %p47
      %p49 = scmp.ne.s32.totalorder %s38, %s39
      %p50 = scmp.eq.s32.totalorder %s16, 0
      %p51 = por %p49, %p50
      %p52 = scmp.ne.s32.totalorder %s38, %s39
      %p53 = scmp.eq.s32.totalorder %s17, 1
      %p54 = por %p52, %p53
      %p56 = scmp.ne.s32.totalorder %s39, %s55
      %p57 = scmp.eq.s32.totalorder %s17, 0
      %p58 = por %p56, %p57
      %s60 = sadd.s32 %s59, 1
      %p63 = scmp.eq.s32.totalorder %s11, 1
      %p64 = scmp.ne.s32.totalorder %s59, %s61
      %p65 = scmp.eq.s32.totalorder %s11, 0
      %p66 = por %p64, %p65
      %p67 = scmp.ne.s32.totalorder %s59, %s61
      %p68 = scmp.eq.s32.totalorder %s16, 1
      %p69 = por %p67, %p68
      %p70 = scmp.ne.s32.totalorder %s61, %s62
      %p71 = scmp.eq.s32.totalorder %s16, 0
      %p72 = por %p70, %p71
      %p73 = scmp.ne.s32.totalorder %s61, %s62
      %p74 = scmp.eq.s32.totalorder %s17, 1
      %p75 = por %p73, %p74
      %p77 = scmp.ne.s32.totalorder %s62, %s76
      %p78 = scmp.eq.s32.totalorder %s17, 0
      %p79 = por %p77, %p78
      %s80 = ssub.s32 %s18, %s30
      %s81 = ssub.s32 %s19, %s26
      %s82 = sor.u32 %s80, %s81
      %p83 = scmp.eq.s32.totalorder %s82, 0
      %s85 = sadd.s32 %s84, 1
      %s86 = scalar_select %p83, %s84, %s85
      %p89 = pneg %p83
      %p90 = scmp.eq.s32.totalorder %s11, 1
      %p91 = por %p89, %p90
      %p92 = scmp.ne.s32.totalorder %s84, %s87
      %p93 = scmp.eq.s32.totalorder %s11, 0
      %p94 = por %p92, %p93
      %p95 = scmp.ne.s32.totalorder %s84, %s87
      %p96 = scmp.eq.s32.totalorder %s16, 1
      %p97 = por %p95, %p96
      %p98 = scmp.ne.s32.totalorder %s87, %s88
      %p99 = scmp.eq.s32.totalorder %s16, 0
      %p100 = por %p98, %p99
      %p101 = scmp.ne.s32.totalorder %s87, %s88
      %p102 = scmp.eq.s32.totalorder %s17, 1
      %p103 = por %p101, %p102
      %p105 = scmp.ne.s32.totalorder %s88, %s104
      %p106 = scmp.eq.s32.totalorder %s17, 0
      %p107 = por %p105, %p106
      %p108 = scmp.le.s32.totalorder 1, %s11
      %p109 = scmp.lt.s32.totalorder %s11, 3
      %p110 = pnand %p108, %p109
      %p111 = pneg %p110
      // Predicated region
      $region9: #{downsample.1} parent=5 // pred_check
        _
      $region10: #{downsample.1} parent=5 // pred_check_branch
        %113 = sbr.rel (%p110) target = $region12
      $region11: #{downsample.1} parent=5 // pred_region
        %s114 = ssub.s32 %s11, 1
        // Predicated region
        $region13: #{downsample.1} parent=11 // pred_check
          %p115 = pneg %p72
        $region14: #{downsample.1} parent=11 // pred_check_branch
          %117 = sbr.rel (%p115) target = $region16
        $region15: #{downsample.1} parent=11 // pred_region
          _
        $region16: #{downsample.1} parent=11 // pred_fallthru
          _
      $region12: #{downsample.1} parent=5 // pred_fallthru
        _
      %p118 = scmp.lt.s32.totalorder %s11, 2
      // Predicated region
      $region17: #{downsample.1} parent=5 // pred_check
        %p119 = pneg %p118
      $region18: #{downsample.1} parent=5 // pred_check_branch
        %121 = sbr.rel (%p119) target = $region20
      $region19: #{downsample.1} parent=5 // pred_region
        // Predicated region
        $region21: #{downsample.1} parent=19 // pred_check
          %p122 = pneg %p45
        $region22: #{downsample.1} parent=19 // pred_check_branch
          %124 = sbr.rel (%p122) target = $region24
        $region23: #{downsample.1} parent=19 // pred_region
          %p125 = scmp.lt.s32.totalorder %s18, 1
          %s126 = scalar_select %p125, %s18, 1
          %p127 = scmp.lt.s32.totalorder %s19, 0
          %s128 = scalar_select %p127, %s19, 0
          %s129 = smul.addr %s128, 2
          %s130 = smul.addr %s126, 2
          %s131 = sadd.s32 %s129, %s130
          %s132 = smul.addr %s131, 8
          %s133 = scalar_lea.vmem %s0, %s132
        $region24: #{downsample.1} parent=19 // pred_fallthru
          _
      $region20: #{downsample.1} parent=5 // pred_fallthru
        _
      %p134 = scmp.le.s32.totalorder 1, %s11
      %p135 = scmp.lt.s32.totalorder %s11, 3
      %p136 = pnand %p134, %p135
      %p137 = pneg %p136
      // Predicated region
      $region25: #{downsample.1} parent=5 // pred_check
        _
      $region26: #{downsample.1} parent=5 // pred_check_branch
        %139 = sbr.rel (%p136) target = $region28
      $region27: #{downsample.1} parent=5 // pred_region
        %s140 = ssub.s32 %s11, 1
        %p141 = scmp.lt.s32.totalorder %s20, 1
        %s142 = scalar_select %p141, %s20, 1
        %p143 = scmp.lt.s32.totalorder %s21, 0
        %s144 = scalar_select %p143, %s21, 0
        %s145 = smul.addr %s144, 2
        %s146 = smul.addr %s142, 2
        %s147 = sadd.s32 %s145, %s146
        %s148 = smul.addr %s147, 8
        %s149 = scalar_lea.vmem %s0, %s148
        %p150 = pneg %p51
        %p151 = pneg %p48
        %p152 = pneg %p72
        %p153 = pneg %p69
        %p154 = pneg %p100
        %p155 = pneg %p97
        %s156 = sand.u32 %s87, 1
        %s157 = scalar_lea.sflag [#allocation4], %s156
        %s158 = sand.u32 %s87, 1
        %s159 = smul.addr %s158, 64
        %s160 = scalar_lea.vmem [#allocation3], %s159
        %p161 = scmp.lt.s32.totalorder %s20, 1
        %s162 = scalar_select %p161, %s20, 1
        %p163 = scmp.lt.s32.totalorder %s21, 0
        %s164 = scalar_select %p163, %s21, 0
        %s165 = smul.addr %s164, 2
        %s166 = smul.addr %s162, 2
        %s167 = sadd.s32 %s165, %s166
        %s168 = smul.addr %s167, 8
        %s169 = scalar_lea.vmem %s0, %s168
        %v170 = vld [vmem:[%s169] sm:$0xff]
        %v171 = vld [vmem:[%s169 + $0x8] sm:$0xff]
        %v172 = vld [vmem:[%s1] sm:$0xff]
        %vm173 = vcmask 130048
        %v175 = vsel %vm173, %v172, 0
        %177 = vmatpush.msra.mxu0 0.0
        %178 = vmatpush.msra.mxu0 0.0
        %179 = vmatpush.msra.mxu0 0.0
        %180 = vmatpush.msra.mxu0 0.0
        %181 = vmatpush.msra.mxu0 0.0
        %182 = vmatpush.msra.mxu0 0.0
        %183 = vmatpush.msra.mxu0 0.0
        %184 = vmatpush.msra.mxu0 0.0
        %185 = vmatpush.msra.mxu0 0.0
        %186 = vmatpush.msra.mxu0 0.0
        %187 = vmatpush.msra.mxu0 0.0
        %188 = vmatpush.msra.mxu0 0.0
        %189 = vmatpush.msra.mxu0 0.0
        %190 = vmatpush.msra.mxu0 0.0
        %191 = vmatpush.msra.mxu0 %v171
        %192 = vmatpush.msra.mxu0 %v170
        %193 = vmatmul.f32.gmra.mxu0 %v175
        %v194 = vpop.f32.mrf.mxu0
        %v195 = vadd.f32 0.0, %v194
        %196 = vdwg.mxu0
        %vm197 = vcmask 588800
        %198 = vst.msk [vmem:[#allocation2] sm:$0xff] %vm197, %v195
        %v199 = vld [vmem:[%s169] sm:$0xff]
        %v200 = vld [vmem:[%s169 + $0x8] sm:$0xff]
        %s201 = scalar_lea.vmem %s1, 8
        %v202 = vld [vmem:[%s201] sm:$0xff]
        %205 = vrot.lane.b32.xlu0 %v199, 127
        %v206 = vpop.permute.xlu0 %205
        %207 = vrot.lane.b32.xlu0 %v200, 127
        %v208 = vpop.permute.xlu0 %207
        %v212 = vsel %vm173, %v202, 0
        %214 = vmatpush.msra.mxu0 0.0
        %215 = vmatpush.msra.mxu0 0.0
        %216 = vmatpush.msra.mxu0 0.0
        %217 = vmatpush.msra.mxu0 0.0
        %218 = vmatpush.msra.mxu0 0.0
        %219 = vmatpush.msra.mxu0 0.0
        %220 = vmatpush.msra.mxu0 0.0
        %221 = vmatpush.msra.mxu0 0.0
        %222 = vmatpush.msra.mxu0 0.0
        %223 = vmatpush.msra.mxu0 0.0
        %224 = vmatpush.msra.mxu0 0.0
        %225 = vmatpush.msra.mxu0 0.0
        %226 = vmatpush.msra.mxu0 0.0
        %227 = vmatpush.msra.mxu0 0.0
        %228 = vmatpush.msra.mxu0 %v208
        %229 = vmatpush.msra.mxu0 %v206
        %230 = vmatmul.f32.gmra.mxu0 %v212
        %v231 = vpop.f32.mrf.mxu0
        %v232 = vadd.f32 0.0, %v231
        %233 = vdwg.mxu0
        %v234 = vld [vmem:[#allocation2] sm:$0xff]
        %v235 = vadd.f32 %v234, %v232
        %236 = vst.msk [vmem:[#allocation2] sm:$0xff] %vm197, %v235
        %v237 = vld [vmem:[%s169] sm:$0xff]
        %v238 = vld [vmem:[%s169 + $0x8] sm:$0xff]
        %s239 = scalar_lea.vmem %s1, 16
        %v240 = vld [vmem:[%s239] sm:$0xff]
        %243 = vrot.lane.b32.xlu0 %v237, 119
        %v244 = vpop.permute.xlu0 %243
        %245 = vrot.lane.b32.xlu0 %v238, 119
        %v246 = vpop.permute.xlu0 %245
        %v250 = vsel %vm173, %v240, 0
        %252 = vmatpush.msra.mxu0 0.0
        %253 = vmatpush.msra.mxu0 0.0
        %254 = vmatpush.msra.mxu0 0.0
        %255 = vmatpush.msra.mxu0 0.0
        %256 = vmatpush.msra.mxu0 0.0
        %257 = vmatpush.msra.mxu0 0.0
        %258 = vmatpush.msra.mxu0 0.0
        %259 = vmatpush.msra.mxu0 0.0
        %260 = vmatpush.msra.mxu0 0.0
        %261 = vmatpush.msra.mxu0 0.0
        %262 = vmatpush.msra.mxu0 0.0
        %263 = vmatpush.msra.mxu0 0.0
        %264 = vmatpush.msra.mxu0 0.0
        %265 = vmatpush.msra.mxu0 0.0
        %266 = vmatpush.msra.mxu0 %v246
        %267 = vmatpush.msra.mxu0 %v244
        %268 = vmatmul.f32.gmra.mxu0 %v250
        %v269 = vpop.f32.mrf.mxu0
        %v270 = vadd.f32 0.0, %v269
        %271 = vdwg.mxu0
        %v272 = vld [vmem:[#allocation2] sm:$0xff]
        %v273 = vadd.f32 %v272, %v270
        %274 = vst.msk [vmem:[#allocation2] sm:$0xff] %vm197, %v273
        %v275 = vld [vmem:[%s169] sm:$0xff]
        %v276 = vld [vmem:[%s169 + $0x8] sm:$0xff]
        %s277 = scalar_lea.vmem %s1, 24
        %v278 = vld [vmem:[%s277] sm:$0xff]
        %281 = vrot.lane.b32.xlu0 %v275, 118
        %v282 = vpop.permute.xlu0 %281
        %283 = vrot.lane.b32.xlu0 %v276, 118
        %v284 = vpop.permute.xlu0 %283
        %v288 = vsel %vm173, %v278, 0
        %290 = vmatpush.msra.mxu0 0.0
        %291 = vmatpush.msra.mxu0 0.0
        %292 = vmatpush.msra.mxu0 0.0
        %293 = vmatpush.msra.mxu0 0.0
        %294 = vmatpush.msra.mxu0 0.0
        %295 = vmatpush.msra.mxu0 0.0
        %296 = vmatpush.msra.mxu0 0.0
        %297 = vmatpush.msra.mxu0 0.0
        %298 = vmatpush.msra.mxu0 0.0
        %299 = vmatpush.msra.mxu0 0.0
        %300 = vmatpush.msra.mxu0 0.0
        %301 = vmatpush.msra.mxu0 0.0
        %302 = vmatpush.msra.mxu0 0.0
        %303 = vmatpush.msra.mxu0 0.0
        %304 = vmatpush.msra.mxu0 %v284
        %305 = vmatpush.msra.mxu0 %v282
        %306 = vmatmul.f32.gmra.mxu0 %v288
        %v307 = vpop.f32.mrf.mxu0
        %v308 = vadd.f32 0.0, %v307
        %309 = vdwg.mxu0
        %v310 = vld [vmem:[#allocation2] sm:$0xff]
        %v311 = vadd.f32 %v310, %v308
        %312 = vst.msk [vmem:[#allocation2] sm:$0xff] %vm197, %v311
        %v313 = vld [vmem:[#allocation2] sm:$0xff]
        %v315 = vrot.slane %v313, 1
        %v316 = vrot.slane %v313, 2
        %v317 = vrot.slane %v313, 3
        %v318 = vrot.slane %v313, 4
        %v319 = vrot.slane %v313, 5
        %v320 = vrot.slane %v313, 6
        %v321 = vrot.slane %v313, 7
        %vm329 = vcmask 57344
        %330 = vst.msk [vmem:[%s160] sm:$0x1] %vm329, %v313
        %331 = vst.msk [vmem:[%s160 + $0x8] sm:$0x1] %vm329, %v315
        %332 = vst.msk [vmem:[%s160 + $0x10] sm:$0x1] %vm329, %v316
        %333 = vst.msk [vmem:[%s160 + $0x18] sm:$0x1] %vm329, %v317
        %334 = vst.msk [vmem:[%s160 + $0x20] sm:$0x1] %vm329, %v318
        %335 = vst.msk [vmem:[%s160 + $0x28] sm:$0x1] %vm329, %v319
        %336 = vst.msk [vmem:[%s160 + $0x30] sm:$0x1] %vm329, %v320
        %337 = vst.msk [vmem:[%s160 + $0x38] sm:$0x1] %vm329, %v321
        %v338 = vld [vmem:[#allocation2] sm:$0xff]
        %v340 = vrot.slane %v338, 1
        %v341 = vrot.slane %v338, 2
        %v342 = vrot.slane %v338, 3
        %v343 = vrot.slane %v338, 4
        %v344 = vrot.slane %v338, 5
        %v345 = vrot.slane %v338, 6
        %v346 = vrot.slane %v338, 7
        %v347 = vperm.slane %v338, 0
        %v348 = vperm.slane %v340, 0
        %v349 = vperm.slane %v341, 0
        %v350 = vperm.slane %v342, 0
        %v351 = vperm.slane %v343, 0
        %v352 = vperm.slane %v344, 0
        %v353 = vperm.slane %v345, 0
        %v354 = vperm.slane %v346, 0
        %355 = vrot.lane.b32.xlu0 %v347, 119
        %v356 = vpop.permute.xlu0 %355
        %357 = vrot.lane.b32.xlu0 %v348, 119
        %v358 = vpop.permute.xlu0 %357
        %359 = vrot.lane.b32.xlu0 %v349, 119
        %v360 = vpop.permute.xlu0 %359
        %361 = vrot.lane.b32.xlu0 %v350, 119
        %v362 = vpop.permute.xlu0 %361
        %363 = vrot.lane.b32.xlu0 %v351, 119
        %v364 = vpop.permute.xlu0 %363
        %365 = vrot.lane.b32.xlu0 %v352, 119
        %v366 = vpop.permute.xlu0 %365
        %367 = vrot.lane.b32.xlu0 %v353, 119
        %v368 = vpop.permute.xlu0 %367
        %369 = vrot.lane.b32.xlu0 %v354, 119
        %v370 = vpop.permute.xlu0 %369
        %379 = vst.msk [vmem:[%s160 + $0x1] sm:$0x1] %vm329, %v356
        %380 = vst.msk [vmem:[%s160 + $0x9] sm:$0x1] %vm329, %v358
        %381 = vst.msk [vmem:[%s160 + $0x11] sm:$0x1] %vm329, %v360
        %382 = vst.msk [vmem:[%s160 + $0x19] sm:$0x1] %vm329, %v362
        %383 = vst.msk [vmem:[%s160 + $0x21] sm:$0x1] %vm329, %v364
        %384 = vst.msk [vmem:[%s160 + $0x29] sm:$0x1] %vm329, %v366
        %385 = vst.msk [vmem:[%s160 + $0x31] sm:$0x1] %vm329, %v368
        %386 = vst.msk [vmem:[%s160 + $0x39] sm:$0x1] %vm329, %v370
        %v387 = vld [vmem:[#allocation2] sm:$0xff]
        %v389 = vrot.slane %v387, 1
        %v390 = vrot.slane %v387, 2
        %v391 = vrot.slane %v387, 3
        %v392 = vrot.slane %v387, 4
        %v393 = vrot.slane %v387, 5
        %v394 = vrot.slane %v387, 6
        %v395 = vrot.slane %v387, 7
        %v396 = vperm.slane %v387, 0
        %v397 = vperm.slane %v389, 0
        %v398 = vperm.slane %v390, 0
        %v399 = vperm.slane %v391, 0
        %v400 = vperm.slane %v392, 0
        %v401 = vperm.slane %v393, 0
        %v402 = vperm.slane %v394, 0
        %v403 = vperm.slane %v395, 0
        %404 = vrot.lane.b32.xlu0 %v396, 110
        %v405 = vpop.permute.xlu0 %404
        %406 = vrot.lane.b32.xlu0 %v397, 110
        %v407 = vpop.permute.xlu0 %406
        %408 = vrot.lane.b32.xlu0 %v398, 110
        %v409 = vpop.permute.xlu0 %408
        %410 = vrot.lane.b32.xlu0 %v399, 110
        %v411 = vpop.permute.xlu0 %410
        %412 = vrot.lane.b32.xlu0 %v400, 110
        %v413 = vpop.permute.xlu0 %412
        %414 = vrot.lane.b32.xlu0 %v401, 110
        %v415 = vpop.permute.xlu0 %414
        %416 = vrot.lane.b32.xlu0 %v402, 110
        %v417 = vpop.permute.xlu0 %416
        %418 = vrot.lane.b32.xlu0 %v403, 110
        %v419 = vpop.permute.xlu0 %418
        %428 = vst.msk [vmem:[%s160 + $0x2] sm:$0x1] %vm329, %v405
        %429 = vst.msk [vmem:[%s160 + $0xa] sm:$0x1] %vm329, %v407
        %430 = vst.msk [vmem:[%s160 + $0x12] sm:$0x1] %vm329, %v409
        %431 = vst.msk [vmem:[%s160 + $0x1a] sm:$0x1] %vm329, %v411
        %432 = vst.msk [vmem:[%s160 + $0x22] sm:$0x1] %vm329, %v413
        %433 = vst.msk [vmem:[%s160 + $0x2a] sm:$0x1] %vm329, %v415
        %434 = vst.msk [vmem:[%s160 + $0x32] sm:$0x1] %vm329, %v417
        %435 = vst.msk [vmem:[%s160 + $0x3a] sm:$0x1] %vm329, %v419
        %v436 = vld [vmem:[#allocation2] sm:$0xff]
        %v438 = vrot.slane %v436, 1
        %v439 = vrot.slane %v436, 2
        %v440 = vrot.slane %v436, 3
        %v441 = vrot.slane %v436, 4
        %v442 = vrot.slane %v436, 5
        %v443 = vrot.slane %v436, 6
        %v444 = vrot.slane %v436, 7
        %v445 = vperm.slane %v436, 0
        %v446 = vperm.slane %v438, 0
        %v447 = vperm.slane %v439, 0
        %v448 = vperm.slane %v440, 0
        %v449 = vperm.slane %v441, 0
        %v450 = vperm.slane %v442, 0
        %v451 = vperm.slane %v443, 0
        %v452 = vperm.slane %v444, 0
        %453 = vrot.lane.b32.xlu0 %v445, 101
        %v454 = vpop.permute.xlu0 %453
        %455 = vrot.lane.b32.xlu0 %v446, 101
        %v456 = vpop.permute.xlu0 %455
        %457 = vrot.lane.b32.xlu0 %v447, 101
        %v458 = vpop.permute.xlu0 %457
        %459 = vrot.lane.b32.xlu0 %v448, 101
        %v460 = vpop.permute.xlu0 %459
        %461 = vrot.lane.b32.xlu0 %v449, 101
        %v462 = vpop.permute.xlu0 %461
        %463 = vrot.lane.b32.xlu0 %v450, 101
        %v464 = vpop.permute.xlu0 %463
        %465 = vrot.lane.b32.xlu0 %v451, 101
        %v466 = vpop.permute.xlu0 %465
        %467 = vrot.lane.b32.xlu0 %v452, 101
        %v468 = vpop.permute.xlu0 %467
        %477 = vst.msk [vmem:[%s160 + $0x3] sm:$0x1] %vm329, %v454
        %478 = vst.msk [vmem:[%s160 + $0xb] sm:$0x1] %vm329, %v456
        %479 = vst.msk [vmem:[%s160 + $0x13] sm:$0x1] %vm329, %v458
        %480 = vst.msk [vmem:[%s160 + $0x1b] sm:$0x1] %vm329, %v460
        %481 = vst.msk [vmem:[%s160 + $0x23] sm:$0x1] %vm329, %v462
        %482 = vst.msk [vmem:[%s160 + $0x2b] sm:$0x1] %vm329, %v464
        %483 = vst.msk [vmem:[%s160 + $0x33] sm:$0x1] %vm329, %v466
        %484 = vst.msk [vmem:[%s160 + $0x3b] sm:$0x1] %vm329, %v468
        %v485 = vld [vmem:[#allocation2] sm:$0xff]
        %v487 = vrot.slane %v485, 1
        %v488 = vrot.slane %v485, 2
        %v489 = vrot.slane %v485, 3
        %v490 = vrot.slane %v485, 4
        %v491 = vrot.slane %v485, 5
        %v492 = vrot.slane %v485, 6
        %v493 = vrot.slane %v485, 7
        %v494 = vperm.slane %v485, 0
        %v495 = vperm.slane %v487, 0
        %v496 = vperm.slane %v488, 0
        %v497 = vperm.slane %v489, 0
        %v498 = vperm.slane %v490, 0
        %v499 = vperm.slane %v491, 0
        %v500 = vperm.slane %v492, 0
        %v501 = vperm.slane %v493, 0
        %502 = vrot.lane.b32.xlu0 %v494, 92
        %v503 = vpop.permute.xlu0 %502
        %504 = vrot.lane.b32.xlu0 %v495, 92
        %v505 = vpop.permute.xlu0 %504
        %506 = vrot.lane.b32.xlu0 %v496, 92
        %v507 = vpop.permute.xlu0 %506
        %508 = vrot.lane.b32.xlu0 %v497, 92
        %v509 = vpop.permute.xlu0 %508
        %510 = vrot.lane.b32.xlu0 %v498, 92
        %v511 = vpop.permute.xlu0 %510
        %512 = vrot.lane.b32.xlu0 %v499, 92
        %v513 = vpop.permute.xlu0 %512
        %514 = vrot.lane.b32.xlu0 %v500, 92
        %v515 = vpop.permute.xlu0 %514
        %516 = vrot.lane.b32.xlu0 %v501, 92
        %v517 = vpop.permute.xlu0 %516
        %526 = vst.msk [vmem:[%s160 + $0x4] sm:$0x1] %vm329, %v503
        %527 = vst.msk [vmem:[%s160 + $0xc] sm:$0x1] %vm329, %v505
        %528 = vst.msk [vmem:[%s160 + $0x14] sm:$0x1] %vm329, %v507
        %529 = vst.msk [vmem:[%s160 + $0x1c] sm:$0x1] %vm329, %v509
        %530 = vst.msk [vmem:[%s160 + $0x24] sm:$0x1] %vm329, %v511
        %531 = vst.msk [vmem:[%s160 + $0x2c] sm:$0x1] %vm329, %v513
        %532 = vst.msk [vmem:[%s160 + $0x34] sm:$0x1] %vm329, %v515
        %533 = vst.msk [vmem:[%s160 + $0x3c] sm:$0x1] %vm329, %v517
        %v534 = vld [vmem:[#allocation2] sm:$0xff]
        %v536 = vrot.slane %v534, 1
        %v537 = vrot.slane %v534, 2
        %v538 = vrot.slane %v534, 3
        %v539 = vrot.slane %v534, 4
        %v540 = vrot.slane %v534, 5
        %v541 = vrot.slane %v534, 6
        %v542 = vrot.slane %v534, 7
        %v543 = vperm.slane %v534, 0
        %v544 = vperm.slane %v536, 0
        %v545 = vperm.slane %v537, 0
        %v546 = vperm.slane %v538, 0
        %v547 = vperm.slane %v539, 0
        %v548 = vperm.slane %v540, 0
        %v549 = vperm.slane %v541, 0
        %v550 = vperm.slane %v542, 0
        %551 = vrot.lane.b32.xlu0 %v543, 83
        %v552 = vpop.permute.xlu0 %551
        %553 = vrot.lane.b32.xlu0 %v544, 83
        %v554 = vpop.permute.xlu0 %553
        %555 = vrot.lane.b32.xlu0 %v545, 83
        %v556 = vpop.permute.xlu0 %555
        %557 = vrot.lane.b32.xlu0 %v546, 83
        %v558 = vpop.permute.xlu0 %557
        %559 = vrot.lane.b32.xlu0 %v547, 83
        %v560 = vpop.permute.xlu0 %559
        %561 = vrot.lane.b32.xlu0 %v548, 83
        %v562 = vpop.permute.xlu0 %561
        %563 = vrot.lane.b32.xlu0 %v549, 83
        %v564 = vpop.permute.xlu0 %563
        %565 = vrot.lane.b32.xlu0 %v550, 83
        %v566 = vpop.permute.xlu0 %565
        %575 = vst.msk [vmem:[%s160 + $0x5] sm:$0x1] %vm329, %v552
        %576 = vst.msk [vmem:[%s160 + $0xd] sm:$0x1] %vm329, %v554
        %577 = vst.msk [vmem:[%s160 + $0x15] sm:$0x1] %vm329, %v556
        %578 = vst.msk [vmem:[%s160 + $0x1d] sm:$0x1] %vm329, %v558
        %579 = vst.msk [vmem:[%s160 + $0x25] sm:$0x1] %vm329, %v560
        %580 = vst.msk [vmem:[%s160 + $0x2d] sm:$0x1] %vm329, %v562
        %581 = vst.msk [vmem:[%s160 + $0x35] sm:$0x1] %vm329, %v564
        %582 = vst.msk [vmem:[%s160 + $0x3d] sm:$0x1] %vm329, %v566
        %v583 = vld [vmem:[#allocation2] sm:$0xff]
        %v585 = vrot.slane %v583, 1
        %v586 = vrot.slane %v583, 2
        %v587 = vrot.slane %v583, 3
        %v588 = vrot.slane %v583, 4
        %v589 = vrot.slane %v583, 5
        %v590 = vrot.slane %v583, 6
        %v591 = vrot.slane %v583, 7
        %v592 = vperm.slane %v583, 0
        %v593 = vperm.slane %v585, 0
        %v594 = vperm.slane %v586, 0
        %v595 = vperm.slane %v587, 0
        %v596 = vperm.slane %v588, 0
        %v597 = vperm.slane %v589, 0
        %v598 = vperm.slane %v590, 0
        %v599 = vperm.slane %v591, 0
        %600 = vrot.lane.b32.xlu0 %v592, 74
        %v601 = vpop.permute.xlu0 %600
        %602 = vrot.lane.b32.xlu0 %v593, 74
        %v603 = vpop.permute.xlu0 %602
        %604 = vrot.lane.b32.xlu0 %v594, 74
        %v605 = vpop.permute.xlu0 %604
        %606 = vrot.lane.b32.xlu0 %v595, 74
        %v607 = vpop.permute.xlu0 %606
        %608 = vrot.lane.b32.xlu0 %v596, 74
        %v609 = vpop.permute.xlu0 %608
        %610 = vrot.lane.b32.xlu0 %v597, 74
        %v611 = vpop.permute.xlu0 %610
        %612 = vrot.lane.b32.xlu0 %v598, 74
        %v613 = vpop.permute.xlu0 %612
        %614 = vrot.lane.b32.xlu0 %v599, 74
        %v615 = vpop.permute.xlu0 %614
        %624 = vst.msk [vmem:[%s160 + $0x6] sm:$0x1] %vm329, %v601
        %625 = vst.msk [vmem:[%s160 + $0xe] sm:$0x1] %vm329, %v603
        %626 = vst.msk [vmem:[%s160 + $0x16] sm:$0x1] %vm329, %v605
        %627 = vst.msk [vmem:[%s160 + $0x1e] sm:$0x1] %vm329, %v607
        %628 = vst.msk [vmem:[%s160 + $0x26] sm:$0x1] %vm329, %v609
        %629 = vst.msk [vmem:[%s160 + $0x2e] sm:$0x1] %vm329, %v611
        %630 = vst.msk [vmem:[%s160 + $0x36] sm:$0x1] %vm329, %v613
        %631 = vst.msk [vmem:[%s160 + $0x3e] sm:$0x1] %vm329, %v615
        %v632 = vld [vmem:[#allocation2] sm:$0xff]
        %v634 = vrot.slane %v632, 1
        %v635 = vrot.slane %v632, 2
        %v636 = vrot.slane %v632, 3
        %v637 = vrot.slane %v632, 4
        %v638 = vrot.slane %v632, 5
        %v639 = vrot.slane %v632, 6
        %v640 = vrot.slane %v632, 7
        %v641 = vperm.slane %v632, 0
        %v642 = vperm.slane %v634, 0
        %v643 = vperm.slane %v635, 0
        %v644 = vperm.slane %v636, 0
        %v645 = vperm.slane %v637, 0
        %v646 = vperm.slane %v638, 0
        %v647 = vperm.slane %v639, 0
        %v648 = vperm.slane %v640, 0
        %649 = vrot.lane.b32.xlu0 %v641, 65
        %v650 = vpop.permute.xlu0 %649
        %651 = vrot.lane.b32.xlu0 %v642, 65
        %v652 = vpop.permute.xlu0 %651
        %653 = vrot.lane.b32.xlu0 %v643, 65
        %v654 = vpop.permute.xlu0 %653
        %655 = vrot.lane.b32.xlu0 %v644, 65
        %v656 = vpop.permute.xlu0 %655
        %657 = vrot.lane.b32.xlu0 %v645, 65
        %v658 = vpop.permute.xlu0 %657
        %659 = vrot.lane.b32.xlu0 %v646, 65
        %v660 = vpop.permute.xlu0 %659
        %661 = vrot.lane.b32.xlu0 %v647, 65
        %v662 = vpop.permute.xlu0 %661
        %663 = vrot.lane.b32.xlu0 %v648, 65
        %v664 = vpop.permute.xlu0 %663
        %673 = vst.msk [vmem:[%s160 + $0x7] sm:$0x1] %vm329, %v650
        %674 = vst.msk [vmem:[%s160 + $0xf] sm:$0x1] %vm329, %v652
        %675 = vst.msk [vmem:[%s160 + $0x17] sm:$0x1] %vm329, %v654
        %676 = vst.msk [vmem:[%s160 + $0x1f] sm:$0x1] %vm329, %v656
        %677 = vst.msk [vmem:[%s160 + $0x27] sm:$0x1] %vm329, %v658
        %678 = vst.msk [vmem:[%s160 + $0x2f] sm:$0x1] %vm329, %v660
        %679 = vst.msk [vmem:[%s160 + $0x37] sm:$0x1] %vm329, %v662
        %680 = vst.msk [vmem:[%s160 + $0x3f] sm:$0x1] %vm329, %v664
        %s681 = sand.u32 %s87, 1
        %s682 = scalar_lea.sflag [#allocation4], %s681
        %s683 = sand.u32 %s87, 1
        %s684 = smul.addr %s683, 64
        %s685 = scalar_lea.vmem [#allocation3], %s684
        // Predicated region
        $region29: #{downsample.1} parent=27 // pred_check
          %p686 = pneg %p97
        $region30: #{downsample.1} parent=27 // pred_check_branch
          %688 = sbr.rel (%p686) target = $region32
        $region31: #{downsample.1} parent=27 // pred_region
          %690 = vsyncadd %s682, 0
          %s691 = smul.addr %s20, 8
          %s692 = sadd.s32 %s21, %s691
          %s693 = smul.addr %s692, 8
          %s694 = scalar_lea.hbm %s2, %s693
          %s695 = sshll.u32 %s685, 4
          %s696 = int_to_ptr.vmem [resolvable:$true] %s695
          %s697 = sshll.u32 %s694, 4
          %s698 = int_to_ptr.hbm [resolvable:$true] %s697
          %703 = dma.vmem_to_hbm [thread:$0]  %s696, 1024, %s698, %s682, 128, 128, 8
        $region32: #{downsample.1} parent=27 // pred_fallthru
          _
      $region28: #{downsample.1} parent=5 // pred_fallthru
        _
      %p704 = scmp.le.s32.totalorder 2, %s11
      // Predicated region
      $region33: #{downsample.1} parent=5 // pred_check
        %p705 = pneg %p704
      $region34: #{downsample.1} parent=5 // pred_check_branch
        %707 = sbr.rel (%p705) target = $region36
      $region35: #{downsample.1} parent=5 // pred_region
        %s708 = ssub.s32 %s11, 2
        // Predicated region
        $region37: #{downsample.1} parent=35 // pred_check
          %p709 = pneg %p103
        $region38: #{downsample.1} parent=35 // pred_check_branch
          %711 = sbr.rel (%p709) target = $region40
        $region39: #{downsample.1} parent=35 // pred_region
          %s712 = sand.u32 %s88, 1
          %s713 = scalar_lea.sflag [#allocation4], %s712
          %s714 = sand.u32 %s88, 1
          %s715 = smul.addr %s714, 64
          %s716 = scalar_lea.vmem [#allocation3], %s715
          %718 = dma.done %s713, 1024
        $region40: #{downsample.1} parent=35 // pred_fallthru
          _
      $region36: #{downsample.1} parent=5 // pred_fallthru
        _
    $region6: #{downsample.1} parent=1 // loop_footer
      %s15 = sadd.s32 1, %s11
    $region7: #{downsample.1} parent=1 // loop_footer_branch
      %10 = sbr.rel target = $region3
    $region8: #{downsample.1} parent=1 // loop_exit
      _
    %719 = vsyncpa [#allocation4], 1
    %s720 = scalar_lea.sflag [#allocation4], 1
    %721 = vsyncpa %s720, 1

</llo_original>
